<compile_context>
chip_gen: v6e
topology: v6e:2x2x1
jax: 0.10.0
libtpu: 0.0.40
codegen_flags: <defaults>
</compile_context>

<pallas_src>
import functools

import jax
import jax.numpy as jnp
import numpy as np
from jax.experimental import pallas as pl
from jax.experimental.pallas import tpu as pltpu

# ----------------------------- model dims -----------------------------------
OUTPUT_DIM = 64   # vocab size V
EMB_DIM    = 32   # E
HID_DIM    = 32   # H
N_LAYERS   = 2
BATCH      = 8    # B
SEQ_LEN    = 6    # T (decode steps amortized inside one kernel call)
LANE       = 128


# ----------------------------- Pallas kernel --------------------------------
def _decoder_seq_kernel(ids_ref, state_in_ref,
                        w0x_ref, w0h_ref, wih_ref, whh_ref, b_ref,
                        wfc_ref, bfc_ref,
                        pred_ref, state_out_ref,
                        h_sc, c_sc,
                        *, n_layers, hid_dim, vocab):
    """grid=(T,). Each step = Decoder.forward: embed + L stacked LSTM cells + fc_out."""
    H, L, V = hid_dim, n_layers, vocab
    t = pl.program_id(0)

    # Step 0: unpack lane-dense [B, 2*L*H] initial state into per-layer scratch.
    @pl.when(t == 0)
    def _():
        for l in range(L):
            h_sc[l] = state_in_ref[:, l * H:(l + 1) * H]
            c_sc[l] = state_in_ref[:, (L + l) * H:(L + l + 1) * H]

    ids = ids_ref[0]                                     # [B, 1] int32
    B = ids.shape[0]
    # One-hot token "gather" (out-of-range ids give a zero row; valid ids required).
    onehot = (jax.lax.broadcasted_iota(jnp.int32, (B, V), 1) == ids).astype(jnp.float32)

    hs, cs = [], []
    x = None
    for layer in range(L):                               # static unroll, L is small
        h = h_sc[layer]
        c = c_sc[layer]
        if layer == 0:
            # Embedding + layer-0 bias folded into w0x at pack time.
            gates = (jnp.dot(onehot, w0x_ref[...], preferred_element_type=jnp.float32)
                     + jnp.dot(h, w0h_ref[...], preferred_element_type=jnp.float32))
        else:
            gates = (jnp.dot(x, wih_ref[layer - 1], preferred_element_type=jnp.float32)
                     + jnp.dot(h, whh_ref[layer - 1], preferred_element_type=jnp.float32)
                     + b_ref[layer - 1])                 # [B, 4H]

        # sigmoid via tanh: one EUP pass over the full [B,4H] vreg (vs exp + recip).
        sig = 0.5 * (jnp.tanh(0.5 * gates) + 1.0)
        tnh = jnp.tanh(gates)
        i_g = sig[:, 0 * H:1 * H]
        f_g = sig[:, 1 * H:2 * H]
        g_g = tnh[:, 2 * H:3 * H]
        o_g = sig[:, 3 * H:4 * H]

        c_new = f_g * c + i_g * g_g
        h_new = o_g * jnp.tanh(c_new)

        h_sc[layer] = h_new
        c_sc[layer] = c_new
        hs.append(h_new)
        cs.append(c_new)
        x = h_new                                        # rnn_dropout = identity (eval)

    # Per-step logits, padded to 128 lanes -> unmasked lane-dense store.
    pred_ref[0] = (jnp.dot(x, wfc_ref[...], preferred_element_type=jnp.float32)
                   + bfc_ref[...])

    # Final state: single lane-dense [B, 2*L*H] store, written once at the last step.
    @pl.when(t == pl.num_programs(0) - 1)
    def _():
        state_out_ref[...] = jnp.concatenate(hs + cs, axis=1)


# ----------------------------- wrappers --------------------------------------
def _const_spec(shape):
    zeros = (0,) * len(shape)
    return pl.BlockSpec(shape, lambda t, _z=zeros: _z)


def decoder_decode(tokens, hidden, cell, packed):
    """Runs T consecutive Decoder.forward steps (teacher forcing) in one Pallas call."""
    T, B = tokens.shape
    L, _, H = hidden.shape
    V = packed["vocab"]
    V_pad = packed["w_fc"].shape[1]

    ids = tokens.astype(jnp.int32).reshape(T, B, 1)
    # Lane-dense packed state: [B, 2*L*H] = [h_0 | ... | h_{L-1} | c_0 | ... | c_{L-1}]
    state_in = jnp.concatenate(
        [jnp.transpose(hidden, (1, 0, 2)).reshape(B, L * H),
         jnp.transpose(cell, (1, 0, 2)).reshape(B, L * H)], axis=1)

    kernel = functools.partial(_decoder_seq_kernel, n_layers=L, hid_dim=H, vocab=V)

    pred_pad, state_out = pl.pallas_call(
        kernel,
        out_shape=(
            jax.ShapeDtypeStruct((T, B, V_pad), jnp.float32),
            jax.ShapeDtypeStruct((B, 2 * L * H), jnp.float32),
        ),
        grid_spec=pltpu.PrefetchScalarGridSpec(
            num_scalar_prefetch=0,
            grid=(T,),
            in_specs=[
                pl.BlockSpec((1, B, 1), lambda t: (t, 0, 0)),   # per-step token ids
                _const_spec((B, 2 * L * H)),                    # packed initial state
                _const_spec(packed["w0_x"].shape),              # [V, 4H] emb+bias folded
                _const_spec(packed["w0_h"].shape),              # [H, 4H]
                _const_spec(packed["w_ih_rest"].shape),         # [L-1, H, 4H]
                _const_spec(packed["w_hh_rest"].shape),         # [L-1, H, 4H]
                _const_spec(packed["b_rest"].shape),            # [L-1, 1, 4H]
                _const_spec(packed["w_fc"].shape),              # [H, V_pad]
                _const_spec(packed["b_fc"].shape),              # [1, V_pad]
            ],
            out_specs=(
                pl.BlockSpec((1, B, V_pad), lambda t: (t, 0, 0)),
                pl.BlockSpec((B, 2 * L * H), lambda t: (0, 0)),
            ),
            scratch_shapes=[pltpu.VMEM((L, B, H), jnp.float32),
                            pltpu.VMEM((L, B, H), jnp.float32)],
        ),
        input_output_aliases={1: 1},     # state updated in place
        compiler_params=pltpu.CompilerParams(dimension_semantics=("arbitrary",)),
    )(ids, state_in, packed["w0_x"], packed["w0_h"], packed["w_ih_rest"],
      packed["w_hh_rest"], packed["b_rest"], packed["w_fc"], packed["b_fc"])

    pred = pred_pad[:, :, :V]
    state = state_out.reshape(B, 2, L, H)
    hidden_out = jnp.transpose(state[:, 0], (1, 0, 2))
    cell_out = jnp.transpose(state[:, 1], (1, 0, 2))
    return pred, hidden_out, cell_out


def decoder_forward(dec_input, hidden, cell, packed):
    """Mirrors Decoder.forward exactly for a single step."""
    pred, hidden_out, cell_out = decoder_decode(dec_input[None, :], hidden, cell, packed)
    return pred[0], hidden_out, cell_out


# ----------------------------- param init / packing --------------------------
def init_params(key):
    """PyTorch-equivalent params, already transposed for row-major x @ W matmuls."""
    ks = jax.random.split(key, 3 * N_LAYERS + 3)
    scale = 1.0 / np.sqrt(HID_DIM)
    u = lambda k, shape: jax.random.uniform(k, shape, jnp.float32, -scale, scale)
    layers = []
    for layer in range(N_LAYERS):
        in_dim = EMB_DIM if layer == 0 else HID_DIM
        i = 3 * layer
        layers.append({
            "w_ih": u(ks[i + 0], (in_dim, 4 * HID_DIM)),   # gate order i,f,g,o
            "w_hh": u(ks[i + 1], (HID_DIM, 4 * HID_DIM)),
            "bias": u(ks[i + 2], (1, 4 * HID_DIM)),        # b_ih + b_hh combined
        })
    i = 3 * N_LAYERS
    return {
        "embedding": jax.random.normal(ks[i], (OUTPUT_DIM, EMB_DIM), jnp.float32) * 0.1,
        "layers": layers,
        "w_fc": u(ks[i + 1], (HID_DIM, OUTPUT_DIM)),
        "b_fc": u(ks[i + 2], (1, OUTPUT_DIM)),
    }


def pack_params(params):
    """Kernel-side packing: fold emb+bias into layer-0 weight, pad fc_out to 128 lanes."""
    emb = params["embedding"]                     # [V, E]
    H = params["layers"][0]["w_hh"].shape[0]
    L = len(params["layers"])
    l0 = params["layers"][0]
    # onehot @ (emb @ W_ih0 + b0) == emb[token] @ W_ih0 + b0  (one-hot row sums to 1)
    w0_x = emb @ l0["w_ih"] + l0["bias"]          # [V, 4H]
    w0_h = l0["w_hh"]                             # [H, 4H]
    if L > 1:
        w_ih_rest = jnp.stack([l["w_ih"] for l in params["layers"][1:]])   # [L-1, H, 4H]
        w_hh_rest = jnp.stack([l["w_hh"] for l in params["layers"][1:]])
        b_rest = jnp.stack([l["bias"] for l in params["layers"][1:]])      # [L-1, 1, 4H]
    else:  # dummies (unused) so shapes stay non-empty
        w_ih_rest = jnp.zeros((1, H, 4 * H), jnp.float32)
        w_hh_rest = jnp.zeros((1, H, 4 * H), jnp.float32)
        b_rest = jnp.zeros((1, 1, 4 * H), jnp.float32)
    V = params["w_fc"].shape[1]
    V_pad = max(LANE, ((V + LANE - 1) // LANE) * LANE)
    w_fc = jnp.zeros((H, V_pad), jnp.float32).at[:, :V].set(params["w_fc"])
    b_fc = jnp.zeros((1, V_pad), jnp.float32).at[:, :V].set(params["b_fc"])
    return {"w0_x": w0_x, "w0_h": w0_h, "w_ih_rest": w_ih_rest, "w_hh_rest": w_hh_rest,
            "b_rest": b_rest, "w_fc": w_fc, "b_fc": b_fc, "vocab": V}


# ----------------------------- pure-JAX reference ----------------------------
def decoder_reference_step(dec_input, hidden, cell, params):
    x = jnp.take(params["embedding"], dec_input, axis=0)
    H = params["layers"][0]["w_hh"].shape[0]
    h_out, c_out = [], []
    for layer, p in enumerate(params["layers"]):
        gates = x @ p["w_ih"] + hidden[layer] @ p["w_hh"] + p["bias"]
        i_g = jax.nn.sigmoid(gates[:, 0 * H:1 * H])
        f_g = jax.nn.sigmoid(gates[:, 1 * H:2 * H])
        g_g = jnp.tanh(gates[:, 2 * H:3 * H])
        o_g = jax.nn.sigmoid(gates[:, 3 * H:4 * H])
        c_new = f_g * cell[layer] + i_g * g_g
        h_new = o_g * jnp.tanh(c_new)
        h_out.append(h_new)
        c_out.append(c_new)
        x = h_new
    pred = x @ params["w_fc"] + params["b_fc"]
    return pred, jnp.stack(h_out), jnp.stack(c_out)


def decoder_reference_decode(tokens, hidden, cell, params):
    preds = []
    for t in range(tokens.shape[0]):
        p, hidden, cell = decoder_reference_step(tokens[t], hidden, cell, params)
        preds.append(p)
    return jnp.stack(preds), hidden, cell


# ----------------------------- main ------------------------------------------
if __name__ == "__main__":
    key = jax.random.PRNGKey(0)
    k_p, k_tok, k_h, k_c = jax.random.split(key, 4)

    params = init_params(k_p)
    packed = pack_params(params)
    tokens = jax.random.randint(k_tok, (SEQ_LEN, BATCH), 0, OUTPUT_DIM, jnp.int32)
    hidden = jax.random.normal(k_h, (N_LAYERS, BATCH, HID_DIM), jnp.float32)
    cell   = jax.random.normal(k_c, (N_LAYERS, BATCH, HID_DIM), jnp.float32)

    # Multi-step decode: T timesteps inside one kernel call.
    pred, h_new, c_new = decoder_decode(tokens, hidden, cell, packed)
    jax.block_until_ready((pred, h_new, c_new))

    # Single-step call (exact Decoder.forward interface).
    pred1, h1, c1 = decoder_forward(tokens[0], hidden, cell, packed)
    jax.block_until_ready((pred1, h1, c1))

    # Correctness against pure-JAX reference.
    pred_r, h_r, c_r = decoder_reference_decode(tokens, hidden, cell, params)
    pred1_r, h1_r, c1_r = decoder_reference_step(tokens[0], hidden, cell, params)

    assert pred.shape == (SEQ_LEN, BATCH, OUTPUT_DIM)
    assert h_new.shape == (N_LAYERS, BATCH, HID_DIM)
    assert c_new.shape == (N_LAYERS, BATCH, HID_DIM)
    assert pred1.shape == (BATCH, OUTPUT_DIM)

    assert np.allclose(np.asarray(pred), np.asarray(pred_r), atol=2e-5)
    assert np.allclose(np.asarray(h_new), np.asarray(h_r), atol=2e-5)
    assert np.allclose(np.asarray(c_new), np.asarray(c_r), atol=2e-5)
    assert np.allclose(np.asarray(pred1), np.asarray(pred1_r), atol=2e-5)
    assert np.allclose(np.asarray(h1), np.asarray(h1_r), atol=2e-5)
    assert np.allclose(np.asarray(c1), np.asarray(c1_r), atol=2e-5)

    print("KERNEL_OK")
</pallas_src>

<mosaic_0001>
module attributes {stable_mosaic.version = 11 : i64} {
  func.func @_decoder_seq_kernel(%arg0: i32, %arg1: memref<1x8x1xi32, #tpu.memory_space<vmem>>, %arg2: memref<8x128xf32, #tpu.memory_space<vmem>>, %arg3: memref<64x128xf32, #tpu.memory_space<vmem>>, %arg4: memref<32x128xf32, #tpu.memory_space<vmem>>, %arg5: memref<1x32x128xf32, #tpu.memory_space<vmem>>, %arg6: memref<1x32x128xf32, #tpu.memory_space<vmem>>, %arg7: memref<1x1x128xf32, #tpu.memory_space<vmem>>, %arg8: memref<32x128xf32, #tpu.memory_space<vmem>>, %arg9: memref<1x128xf32, #tpu.memory_space<vmem>>, %arg10: memref<1x8x128xf32, #tpu.memory_space<vmem>>, %arg11: memref<8x128xf32, #tpu.memory_space<vmem>>, %arg12: memref<2x8x32xf32, #tpu.memory_space<vmem>>, %arg13: memref<2x8x32xf32, #tpu.memory_space<vmem>>) attributes {dimension_semantics = [#tpu.dimension_semantics<arbitrary>], iteration_bounds = array<i64: 6>, scalar_prefetch = 0 : i64, scratch_operands = 2 : i64, tpu.core_type = #tpu.core_type<tc>, window_params = [{transform_indices = @transform_0, window_bounds = array<i64: 1, 8, 1>}, {pipeline_mode = #tpu.pipeline_mode<synchronous>, transform_indices = @transform_1, window_bounds = array<i64: 8, 128>}, {pipeline_mode = #tpu.pipeline_mode<synchronous>, transform_indices = @transform_2, window_bounds = array<i64: 64, 128>}, {pipeline_mode = #tpu.pipeline_mode<synchronous>, transform_indices = @transform_3, window_bounds = array<i64: 32, 128>}, {pipeline_mode = #tpu.pipeline_mode<synchronous>, transform_indices = @transform_4, window_bounds = array<i64: 1, 32, 128>}, {pipeline_mode = #tpu.pipeline_mode<synchronous>, transform_indices = @transform_5, window_bounds = array<i64: 1, 32, 128>}, {pipeline_mode = #tpu.pipeline_mode<synchronous>, transform_indices = @transform_6, window_bounds = array<i64: 1, 1, 128>}, {pipeline_mode = #tpu.pipeline_mode<synchronous>, transform_indices = @transform_7, window_bounds = array<i64: 32, 128>}, {pipeline_mode = #tpu.pipeline_mode<synchronous>, transform_indices = @transform_8, window_bounds = array<i64: 1, 128>}, {transform_indices = @transform_9, window_bounds = array<i64: 1, 8, 128>}, {pipeline_mode = #tpu.pipeline_mode<synchronous>, transform_indices = @transform_10, window_bounds = array<i64: 8, 128>}]} {
    %c0_i32 = arith.constant 0 : i32
    %0 = arith.cmpi eq, %arg0, %c0_i32 : i32
    %1 = arith.extui %0 : i1 to i32
    %c0_i32_0 = arith.constant 0 : i32
    %2 = arith.cmpi ne, %1, %c0_i32_0 : i32
    scf.if %2 {
      %c0_57 = arith.constant 0 : index
      %c0_58 = arith.constant 0 : index
      %91 = vector.load %arg2[%c0_57, %c0_58] : memref<8x128xf32, #tpu.memory_space<vmem>>, vector<8x32xf32>
      %c0_59 = arith.constant 0 : index
      %c0_60 = arith.constant 0 : index
      %c0_61 = arith.constant 0 : index
      %92 = vector.load %arg12[%c0_59, %c0_60, %c0_61] : memref<2x8x32xf32, #tpu.memory_space<vmem>>, vector<1x8x32xf32>
      %93 = vector.shape_cast %92 : vector<1x8x32xf32> to vector<8x32xf32>
      %94 = vector.shape_cast %91 : vector<8x32xf32> to vector<1x8x32xf32>
      tpu.vector_store %arg12[%c0_59, %c0_60, %c0_61], %94 {strides = array<i32>} : memref<2x8x32xf32, #tpu.memory_space<vmem>>, vector<1x8x32xf32>,
      %c0_62 = arith.constant 0 : index
      %c64 = arith.constant 64 : index
      %95 = vector.load %arg2[%c0_62, %c64] : memref<8x128xf32, #tpu.memory_space<vmem>>, vector<8x32xf32>
      %c0_63 = arith.constant 0 : index
      %c0_64 = arith.constant 0 : index
      %c0_65 = arith.constant 0 : index
      %96 = vector.load %arg13[%c0_63, %c0_64, %c0_65] : memref<2x8x32xf32, #tpu.memory_space<vmem>>, vector<1x8x32xf32>
      %97 = vector.shape_cast %96 : vector<1x8x32xf32> to vector<8x32xf32>
      %98 = vector.shape_cast %95 : vector<8x32xf32> to vector<1x8x32xf32>
      tpu.vector_store %arg13[%c0_63, %c0_64, %c0_65], %98 {strides = array<i32>} : memref<2x8x32xf32, #tpu.memory_space<vmem>>, vector<1x8x32xf32>,
      %c0_66 = arith.constant 0 : index
      %c32 = arith.constant 32 : index
      %99 = vector.load %arg2[%c0_66, %c32] : memref<8x128xf32, #tpu.memory_space<vmem>>, vector<8x32xf32>
      %c1_67 = arith.constant 1 : index
      %c0_68 = arith.constant 0 : index
      %c0_69 = arith.constant 0 : index
      %100 = vector.load %arg12[%c1_67, %c0_68, %c0_69] : memref<2x8x32xf32, #tpu.memory_space<vmem>>, vector<1x8x32xf32>
      %101 = vector.shape_cast %100 : vector<1x8x32xf32> to vector<8x32xf32>
      %102 = vector.shape_cast %99 : vector<8x32xf32> to vector<1x8x32xf32>
      tpu.vector_store %arg12[%c1_67, %c0_68, %c0_69], %102 {strides = array<i32>} : memref<2x8x32xf32, #tpu.memory_space<vmem>>, vector<1x8x32xf32>,
      %c0_70 = arith.constant 0 : index
      %c96 = arith.constant 96 : index
      %103 = vector.load %arg2[%c0_70, %c96] : memref<8x128xf32, #tpu.memory_space<vmem>>, vector<8x32xf32>
      %c1_71 = arith.constant 1 : index
      %c0_72 = arith.constant 0 : index
      %c0_73 = arith.constant 0 : index
      %104 = vector.load %arg13[%c1_71, %c0_72, %c0_73] : memref<2x8x32xf32, #tpu.memory_space<vmem>>, vector<1x8x32xf32>
      %105 = vector.shape_cast %104 : vector<1x8x32xf32> to vector<8x32xf32>
      %106 = vector.shape_cast %103 : vector<8x32xf32> to vector<1x8x32xf32>
      tpu.vector_store %arg13[%c1_71, %c0_72, %c0_73], %106 {strides = array<i32>} : memref<2x8x32xf32, #tpu.memory_space<vmem>>, vector<1x8x32xf32>,
    } else {
    }
    %c0 = arith.constant 0 : index
    %c0_1 = arith.constant 0 : index
    %c0_2 = arith.constant 0 : index
    %3 = vector.load %arg1[%c0, %c0_1, %c0_2] : memref<1x8x1xi32, #tpu.memory_space<vmem>>, vector<1x8x1xi32>
    %4 = vector.shape_cast %3 : vector<1x8x1xi32> to vector<8x1xi32>
    %5 = tpu.iota {dimensions = array<i32: 1>} : vector<8x64xi32>
    %6 = vector.broadcast %4 : vector<8x1xi32> to vector<8x64xi32>
    %7 = arith.cmpi eq, %5, %6 : vector<8x64xi32>
    %8 = arith.extui %7 : vector<8x64xi1> to vector<8x64xi32>
    %9 = arith.sitofp %8 : vector<8x64xi32> to vector<8x64xf32>
    %c0_3 = arith.constant 0 : index
    %c0_4 = arith.constant 0 : index
    %c0_5 = arith.constant 0 : index
    %10 = vector.load %arg12[%c0_3, %c0_4, %c0_5] : memref<2x8x32xf32, #tpu.memory_space<vmem>>, vector<1x8x32xf32>
    %11 = vector.shape_cast %10 : vector<1x8x32xf32> to vector<8x32xf32>
    %c0_6 = arith.constant 0 : index
    %c0_7 = arith.constant 0 : index
    %c0_8 = arith.constant 0 : index
    %12 = vector.load %arg13[%c0_6, %c0_7, %c0_8] : memref<2x8x32xf32, #tpu.memory_space<vmem>>, vector<1x8x32xf32>
    %13 = vector.shape_cast %12 : vector<1x8x32xf32> to vector<8x32xf32>
    %c0_9 = arith.constant 0 : index
    %c0_10 = arith.constant 0 : index
    %14 = vector.load %arg3[%c0_9, %c0_10] : memref<64x128xf32, #tpu.memory_space<vmem>>, vector<64x128xf32>
    %cst = arith.constant dense<0.000000e+00> : vector<8x128xf32>
    %15 = tpu.matmul %9, %14, %cst {dimension_numbers = #tpu.dot_dimension_numbers<[1], [0], [0], [1], [0, 0, 1, 1], [], []>} : vector<8x64xf32>, vector<64x128xf32>, vector<8x128xf32> -> vector<8x128xf32>
    %c0_11 = arith.constant 0 : index
    %c0_12 = arith.constant 0 : index
    %16 = vector.load %arg4[%c0_11, %c0_12] : memref<32x128xf32, #tpu.memory_space<vmem>>, vector<32x128xf32>
    %cst_13 = arith.constant dense<0.000000e+00> : vector<8x128xf32>
    %17 = tpu.matmul %11, %16, %cst_13 {dimension_numbers = #tpu.dot_dimension_numbers<[1], [0], [0], [1], [0, 0, 1, 1], [], []>} : vector<8x32xf32>, vector<32x128xf32>, vector<8x128xf32> -> vector<8x128xf32>
    %18 = arith.addf %15, %17 : vector<8x128xf32>
    %cst_14 = arith.constant 5.000000e-01 : f32
    %19 = vector.broadcast %cst_14 : f32 to vector<8x128xf32>
    %20 = arith.mulf %19, %18 : vector<8x128xf32>
    %21 = math.tanh %20 : vector<8x128xf32>
    %cst_15 = arith.constant 1.000000e+00 : f32
    %22 = vector.broadcast %cst_15 : f32 to vector<8x128xf32>
    %23 = arith.addf %21, %22 : vector<8x128xf32>
    %cst_16 = arith.constant 5.000000e-01 : f32
    %24 = vector.broadcast %cst_16 : f32 to vector<8x128xf32>
    %25 = arith.mulf %24, %23 : vector<8x128xf32>
    %26 = math.tanh %18 : vector<8x128xf32>
    %27 = vector.extract_strided_slice %25 {offsets = [0, 0], sizes = [8, 32], strides = [1, 1]} : vector<8x128xf32> to vector<8x32xf32>
    %28 = vector.extract_strided_slice %25 {offsets = [0, 32], sizes = [8, 32], strides = [1, 1]} : vector<8x128xf32> to vector<8x32xf32>
    %29 = vector.extract_strided_slice %26 {offsets = [0, 64], sizes = [8, 32], strides = [1, 1]} : vector<8x128xf32> to vector<8x32xf32>
    %30 = vector.extract_strided_slice %25 {offsets = [0, 96], sizes = [8, 32], strides = [1, 1]} : vector<8x128xf32> to vector<8x32xf32>
    %31 = arith.mulf %28, %13 : vector<8x32xf32>
    %32 = arith.mulf %27, %29 : vector<8x32xf32>
    %33 = arith.addf %31, %32 : vector<8x32xf32>
    %34 = math.tanh %33 : vector<8x32xf32>
    %35 = arith.mulf %30, %34 : vector<8x32xf32>
    %c0_17 = arith.constant 0 : index
    %c0_18 = arith.constant 0 : index
    %c0_19 = arith.constant 0 : index
    %36 = vector.load %arg12[%c0_17, %c0_18, %c0_19] : memref<2x8x32xf32, #tpu.memory_space<vmem>>, vector<1x8x32xf32>
    %37 = vector.shape_cast %36 : vector<1x8x32xf32> to vector<8x32xf32>
    %38 = vector.shape_cast %35 : vector<8x32xf32> to vector<1x8x32xf32>
    tpu.vector_store %arg12[%c0_17, %c0_18, %c0_19], %38 {strides = array<i32>} : memref<2x8x32xf32, #tpu.memory_space<vmem>>, vector<1x8x32xf32>,
    %c0_20 = arith.constant 0 : index
    %c0_21 = arith.constant 0 : index
    %c0_22 = arith.constant 0 : index
    %39 = vector.load %arg13[%c0_20, %c0_21, %c0_22] : memref<2x8x32xf32, #tpu.memory_space<vmem>>, vector<1x8x32xf32>
    %40 = vector.shape_cast %39 : vector<1x8x32xf32> to vector<8x32xf32>
    %41 = vector.shape_cast %33 : vector<8x32xf32> to vector<1x8x32xf32>
    tpu.vector_store %arg13[%c0_20, %c0_21, %c0_22], %41 {strides = array<i32>} : memref<2x8x32xf32, #tpu.memory_space<vmem>>, vector<1x8x32xf32>,
    %c1 = arith.constant 1 : index
    %c0_23 = arith.constant 0 : index
    %c0_24 = arith.constant 0 : index
    %42 = vector.load %arg12[%c1, %c0_23, %c0_24] : memref<2x8x32xf32, #tpu.memory_space<vmem>>, vector<1x8x32xf32>
    %43 = vector.shape_cast %42 : vector<1x8x32xf32> to vector<8x32xf32>
    %c1_25 = arith.constant 1 : index
    %c0_26 = arith.constant 0 : index
    %c0_27 = arith.constant 0 : index
    %44 = vector.load %arg13[%c1_25, %c0_26, %c0_27] : memref<2x8x32xf32, #tpu.memory_space<vmem>>, vector<1x8x32xf32>
    %45 = vector.shape_cast %44 : vector<1x8x32xf32> to vector<8x32xf32>
    %c0_28 = arith.constant 0 : index
    %c0_29 = arith.constant 0 : index
    %c0_30 = arith.constant 0 : index
    %46 = vector.load %arg5[%c0_28, %c0_29, %c0_30] : memref<1x32x128xf32, #tpu.memory_space<vmem>>, vector<1x32x128xf32>
    %47 = vector.shape_cast %46 : vector<1x32x128xf32> to vector<32x128xf32>
    %cst_31 = arith.constant dense<0.000000e+00> : vector<8x128xf32>
    %48 = tpu.matmul %35, %47, %cst_31 {dimension_numbers = #tpu.dot_dimension_numbers<[1], [0], [0], [1], [0, 0, 1, 1], [], []>} : vector<8x32xf32>, vector<32x128xf32>, vector<8x128xf32> -> vector<8x128xf32>
    %c0_32 = arith.constant 0 : index
    %c0_33 = arith.constant 0 : index
    %c0_34 = arith.constant 0 : index
    %49 = vector.load %arg6[%c0_32, %c0_33, %c0_34] : memref<1x32x128xf32, #tpu.memory_space<vmem>>, vector<1x32x128xf32>
    %50 = vector.shape_cast %49 : vector<1x32x128xf32> to vector<32x128xf32>
    %cst_35 = arith.constant dense<0.000000e+00> : vector<8x128xf32>
    %51 = tpu.matmul %43, %50, %cst_35 {dimension_numbers = #tpu.dot_dimension_numbers<[1], [0], [0], [1], [0, 0, 1, 1], [], []>} : vector<8x32xf32>, vector<32x128xf32>, vector<8x128xf32> -> vector<8x128xf32>
    %52 = arith.addf %48, %51 : vector<8x128xf32>
    %c0_36 = arith.constant 0 : index
    %c0_37 = arith.constant 0 : index
    %c0_38 = arith.constant 0 : index
    %53 = vector.load %arg7[%c0_36, %c0_37, %c0_38] : memref<1x1x128xf32, #tpu.memory_space<vmem>>, vector<1x1x128xf32>
    %54 = vector.shape_cast %53 : vector<1x1x128xf32> to vector<1x128xf32>
    %55 = vector.broadcast %54 : vector<1x128xf32> to vector<8x128xf32>
    %56 = arith.addf %52, %55 : vector<8x128xf32>
    %cst_39 = arith.constant 5.000000e-01 : f32
    %57 = vector.broadcast %cst_39 : f32 to vector<8x128xf32>
    %58 = arith.mulf %57, %56 : vector<8x128xf32>
    %59 = math.tanh %58 : vector<8x128xf32>
    %cst_40 = arith.constant 1.000000e+00 : f32
    %60 = vector.broadcast %cst_40 : f32 to vector<8x128xf32>
    %61 = arith.addf %59, %60 : vector<8x128xf32>
    %cst_41 = arith.constant 5.000000e-01 : f32
    %62 = vector.broadcast %cst_41 : f32 to vector<8x128xf32>
    %63 = arith.mulf %62, %61 : vector<8x128xf32>
    %64 = math.tanh %56 : vector<8x128xf32>
    %65 = vector.extract_strided_slice %63 {offsets = [0, 0], sizes = [8, 32], strides = [1, 1]} : vector<8x128xf32> to vector<8x32xf32>
    %66 = vector.extract_strided_slice %63 {offsets = [0, 32], sizes = [8, 32], strides = [1, 1]} : vector<8x128xf32> to vector<8x32xf32>
    %67 = vector.extract_strided_slice %64 {offsets = [0, 64], sizes = [8, 32], strides = [1, 1]} : vector<8x128xf32> to vector<8x32xf32>
    %68 = vector.extract_strided_slice %63 {offsets = [0, 96], sizes = [8, 32], strides = [1, 1]} : vector<8x128xf32> to vector<8x32xf32>
    %69 = arith.mulf %66, %45 : vector<8x32xf32>
    %70 = arith.mulf %65, %67 : vector<8x32xf32>
    %71 = arith.addf %69, %70 : vector<8x32xf32>
    %72 = math.tanh %71 : vector<8x32xf32>
    %73 = arith.mulf %68, %72 : vector<8x32xf32>
    %c1_42 = arith.constant 1 : index
    %c0_43 = arith.constant 0 : index
    %c0_44 = arith.constant 0 : index
    %74 = vector.load %arg12[%c1_42, %c0_43, %c0_44] : memref<2x8x32xf32, #tpu.memory_space<vmem>>, vector<1x8x32xf32>
    %75 = vector.shape_cast %74 : vector<1x8x32xf32> to vector<8x32xf32>
    %76 = vector.shape_cast %73 : vector<8x32xf32> to vector<1x8x32xf32>
    tpu.vector_store %arg12[%c1_42, %c0_43, %c0_44], %76 {strides = array<i32>} : memref<2x8x32xf32, #tpu.memory_space<vmem>>, vector<1x8x32xf32>,
    %c1_45 = arith.constant 1 : index
    %c0_46 = arith.constant 0 : index
    %c0_47 = arith.constant 0 : index
    %77 = vector.load %arg13[%c1_45, %c0_46, %c0_47] : memref<2x8x32xf32, #tpu.memory_space<vmem>>, vector<1x8x32xf32>
    %78 = vector.shape_cast %77 : vector<1x8x32xf32> to vector<8x32xf32>
    %79 = vector.shape_cast %71 : vector<8x32xf32> to vector<1x8x32xf32>
    tpu.vector_store %arg13[%c1_45, %c0_46, %c0_47], %79 {strides = array<i32>} : memref<2x8x32xf32, #tpu.memory_space<vmem>>, vector<1x8x32xf32>,
    %c0_48 = arith.constant 0 : index
    %c0_49 = arith.constant 0 : index
    %80 = vector.load %arg8[%c0_48, %c0_49] : memref<32x128xf32, #tpu.memory_space<vmem>>, vector<32x128xf32>
    %cst_50 = arith.constant dense<0.000000e+00> : vector<8x128xf32>
    %81 = tpu.matmul %73, %80, %cst_50 {dimension_numbers = #tpu.dot_dimension_numbers<[1], [0], [0], [1], [0, 0, 1, 1], [], []>} : vector<8x32xf32>, vector<32x128xf32>, vector<8x128xf32> -> vector<8x128xf32>
    %c0_51 = arith.constant 0 : index
    %c0_52 = arith.constant 0 : index
    %82 = vector.load %arg9[%c0_51, %c0_52] : memref<1x128xf32, #tpu.memory_space<vmem>>, vector<1x128xf32>
    %83 = vector.broadcast %82 : vector<1x128xf32> to vector<8x128xf32>
    %84 = arith.addf %81, %83 : vector<8x128xf32>
    %c0_53 = arith.constant 0 : index
    %c0_54 = arith.constant 0 : index
    %c0_55 = arith.constant 0 : index
    %85 = vector.load %arg10[%c0_53, %c0_54, %c0_55] : memref<1x8x128xf32, #tpu.memory_space<vmem>>, vector<1x8x128xf32>
    %86 = vector.shape_cast %85 : vector<1x8x128xf32> to vector<8x128xf32>
    %87 = vector.shape_cast %84 : vector<8x128xf32> to vector<1x8x128xf32>
    tpu.vector_store %arg10[%c0_53, %c0_54, %c0_55], %87 {strides = array<i32>} : memref<1x8x128xf32, #tpu.memory_space<vmem>>, vector<1x8x128xf32>,
    %c5_i32 = arith.constant 5 : i32
    %88 = arith.cmpi eq, %arg0, %c5_i32 : i32
    %89 = arith.extui %88 : i1 to i32
    %c0_i32_56 = arith.constant 0 : i32
    %90 = arith.cmpi ne, %89, %c0_i32_56 : i32
    scf.if %90 {
      %91 = tpu.concatenate %35, %73, %33, %71 in 1 : vector<8x32xf32>, vector<8x32xf32>, vector<8x32xf32>, vector<8x32xf32> -> vector<8x128xf32>
      %c0_57 = arith.constant 0 : index
      %c0_58 = arith.constant 0 : index
      %92 = vector.load %arg11[%c0_57, %c0_58] : memref<8x128xf32, #tpu.memory_space<vmem>>, vector<8x128xf32>
      tpu.vector_store %arg11[%c0_57, %c0_58], %91 {strides = array<i32>} : memref<8x128xf32, #tpu.memory_space<vmem>>, vector<8x128xf32>,
    } else {
    }
    return
  }
  func.func @transform_0(%arg0: i32) -> (i32, i32, i32) {
    %c0_i32 = arith.constant 0 : i32
    %c0_i32_0 = arith.constant 0 : i32
    %c0_i32_1 = arith.constant 0 : i32
    return %arg0, %c0_i32, %c0_i32_0 : i32, i32, i32
  }
  func.func @transform_1(%arg0: i32) -> (i32, i32) {
    %c0_i32 = arith.constant 0 : i32
    %c0_i32_0 = arith.constant 0 : i32
    %c0_i32_1 = arith.constant 0 : i32
    return %c0_i32, %c0_i32_0 : i32, i32
  }
  func.func @transform_2(%arg0: i32) -> (i32, i32) {
    %c0_i32 = arith.constant 0 : i32
    %c0_i32_0 = arith.constant 0 : i32
    %c0_i32_1 = arith.constant 0 : i32
    return %c0_i32, %c0_i32_0 : i32, i32
  }
  func.func @transform_3(%arg0: i32) -> (i32, i32) {
    %c0_i32 = arith.constant 0 : i32
    %c0_i32_0 = arith.constant 0 : i32
    %c0_i32_1 = arith.constant 0 : i32
    return %c0_i32, %c0_i32_0 : i32, i32
  }
  func.func @transform_4(%arg0: i32) -> (i32, i32, i32) {
    %c0_i32 = arith.constant 0 : i32
    %c0_i32_0 = arith.constant 0 : i32
    %c0_i32_1 = arith.constant 0 : i32
    %c0_i32_2 = arith.constant 0 : i32
    return %c0_i32, %c0_i32_0, %c0_i32_1 : i32, i32, i32
  }
  func.func @transform_5(%arg0: i32) -> (i32, i32, i32) {
    %c0_i32 = arith.constant 0 : i32
    %c0_i32_0 = arith.constant 0 : i32
    %c0_i32_1 = arith.constant 0 : i32
    %c0_i32_2 = arith.constant 0 : i32
    return %c0_i32, %c0_i32_0, %c0_i32_1 : i32, i32, i32
  }
  func.func @transform_6(%arg0: i32) -> (i32, i32, i32) {
    %c0_i32 = arith.constant 0 : i32
    %c0_i32_0 = arith.constant 0 : i32
    %c0_i32_1 = arith.constant 0 : i32
    %c0_i32_2 = arith.constant 0 : i32
    return %c0_i32, %c0_i32_0, %c0_i32_1 : i32, i32, i32
  }
  func.func @transform_7(%arg0: i32) -> (i32, i32) {
    %c0_i32 = arith.constant 0 : i32
    %c0_i32_0 = arith.constant 0 : i32
    %c0_i32_1 = arith.constant 0 : i32
    return %c0_i32, %c0_i32_0 : i32, i32
  }
  func.func @transform_8(%arg0: i32) -> (i32, i32) {
    %c0_i32 = arith.constant 0 : i32
    %c0_i32_0 = arith.constant 0 : i32
    %c0_i32_1 = arith.constant 0 : i32
    return %c0_i32, %c0_i32_0 : i32, i32
  }
  func.func @transform_9(%arg0: i32) -> (i32, i32, i32) {
    %c0_i32 = arith.constant 0 : i32
    %c0_i32_0 = arith.constant 0 : i32
    %c0_i32_1 = arith.constant 0 : i32
    return %arg0, %c0_i32, %c0_i32_0 : i32, i32, i32
  }
  func.func @transform_10(%arg0: i32) -> (i32, i32) {
    %c0_i32 = arith.constant 0 : i32
    %c0_i32_0 = arith.constant 0 : i32
    %c0_i32_1 = arith.constant 0 : i32
    return %c0_i32, %c0_i32_0 : i32, i32
  }
}

</mosaic_0001>

<llo_original>
// kernel: tpu_custom_call.1
$region0: #{tpu_custom_call.1}
  #allocation0 [shape = 'u32[]', space=smem, size = 0x4, offset = 0x4, fixed_abs, tag = 'smem constant byte address 0x4 - core index']
  #allocation1 [shape = 'u32[144,128]{1,0:T(1,128)}', space=vmem, size = 0x12000, scoped, tag = 'internal scratch']
  #allocation2 [shape = 'f32[2,8,32]{2,1,0:T(8,128)}', space=vmem, size = 0x2000, scoped, tag = 'scratch operand']
  #allocation3 [shape = 'f32[2,8,32]{2,1,0:T(8,128)}', space=vmem, size = 0x2000, scoped, tag = 'scratch operand']
  %s0 = inlined_call_operand.vmem [shape: s32[6,8,1], index: 0, kind: input, shape index: {}]
  %s1 = inlined_call_operand.hbm [shape: f32[8,128], index: 1, kind: input, shape index: {}, may-alias: {1,10}]
  %s2 = inlined_call_operand.vmem [shape: f32[64,128], index: 2, kind: input, shape index: {}]
  %s3 = inlined_call_operand.hbm [shape: f32[32,128], index: 3, kind: input, shape index: {}]
  %s4 = inlined_call_operand.hbm [shape: f32[1,32,128], index: 4, kind: input, shape index: {}]
  %s5 = inlined_call_operand.hbm [shape: f32[1,32,128], index: 5, kind: input, shape index: {}]
  %s6 = inlined_call_operand.vmem [shape: f32[1,1,128], index: 6, kind: input, shape index: {}]
  %s7 = inlined_call_operand.hbm [shape: f32[32,128], index: 7, kind: input, shape index: {}]
  %s8 = inlined_call_operand.vmem [shape: f32[1,128], index: 8, kind: input, shape index: {}]
  %s9 = inlined_call_operand.hbm [shape: f32[6,8,128], index: 9, kind: output, shape index: {0}]
  %s10 = inlined_call_operand.hbm [shape: f32[8,128], index: 10, kind: output, shape index: {1}, may-alias: {1,10}]
  %11 = xla_tuple %s9, %s10
  %s12 = sld [smem:[#allocation0]]
  $region105: #{tpu_custom_call.1} parent=0
    _
  %s14 = ssub.s32 1, %s12
  %s15 = scalar_select 0, %s14, %s12
  $region1: #{tpu_custom_call.1} parent=0
    #allocation4 [shape = 'u8[4096]{0}', space=vmem, size = 0x1000, scoped, tag = 'input window, operand 1, single buffered']
    #allocation5 [shape = 's32[2]{0}', space=sflag, size = 0x8, scoped, tag = 'scoped memory for tpu_custom_call.1']
    #allocation6 [shape = 's32[2]{0}', space=sflag, size = 0x8, scoped, tag = 'scoped memory for tpu_custom_call.1']
    #allocation7 [shape = 'u8[16384]{0}', space=vmem, size = 0x4000, scoped, tag = 'input window, operand 3, single buffered']
    #allocation8 [shape = 's32[1]{0}', space=sflag, size = 0x4, scoped, tag = 'scoped memory for tpu_custom_call.1']
    #allocation9 [shape = 'u8[16384]{0}', space=vmem, size = 0x4000, scoped, tag = 'input window, operand 4, single buffered']
    #allocation10 [shape = 'u8[16384]{0}', space=vmem, size = 0x4000, scoped, tag = 'input window, operand 5, single buffered']
    #allocation11 [shape = 's32[1]{0}', space=sflag, size = 0x4, scoped, tag = 'scoped memory for tpu_custom_call.1']
    #allocation12 [shape = 'u8[16384]{0}', space=vmem, size = 0x4000, scoped, tag = 'input window, operand 7, single buffered']
    #allocation13 [shape = 'u8[8192]{0}', space=vmem, size = 0x2000, scoped, tag = 'output window, operand 0']
    #allocation14 [shape = 'u8[4096]{0}', space=vmem, size = 0x1000, scoped, tag = 'output window, operand 1, single buffered']
    #allocation15 [shape = 's32[1]{0}', space=sflag, size = 0x4, scoped, tag = 'scoped memory for tpu_custom_call.1']
    %16 = vsyncpa [#allocation5], 0
    %17 = vsyncpa [#allocation8], 0
    %18 = vsyncpa [#allocation11], 0
    %19 = vsyncpa [#allocation6], 0
    %s20 = scalar_lea.sflag [#allocation6], 1
    %21 = vsyncpa %s20, 0
    %22 = vsyncpa [#allocation15], 0
    loop: start=0, step=1, limit=8
    $region2: #{tpu_custom_call.1} parent=1 // loop_pre_header
      _
    $region3: #{tpu_custom_call.1} parent=1 // loop_header
      %s24 = sphi 0, %s28
      %p25 = scmp.ge.s32.totalorder %s24, 8
      %s34 = sphi 0, %s36
      %s37 = sphi 0, %s34
      %s38 = sphi 0, %s37
      %s54 = sphi 0, %s38
      %s58 = sphi 0, %s58
      %s60 = sphi 0, %s58
      %s61 = sphi 0, %s60
      %s75 = sphi 0, %s61
      %s79 = sphi 0, %s79
      %s81 = sphi 0, %s79
      %s82 = sphi 0, %s81
      %s96 = sphi 0, %s82
      %s100 = sphi 0, %s100
      %s102 = sphi 0, %s100
      %s103 = sphi 0, %s102
      %s117 = sphi 0, %s103
      %s121 = sphi 0, %s121
      %s123 = sphi 0, %s121
      %s124 = sphi 0, %s123
      %s138 = sphi 0, %s124
      %s142 = sphi 0, %s142
      %s144 = sphi 0, %s142
      %s145 = sphi 0, %s144
      %s159 = sphi 0, %s145
      %s163 = sphi 0, %s163
      %s165 = sphi 0, %s163
      %s166 = sphi 0, %s165
      %s180 = sphi 0, %s166
      %s184 = sphi 0, %s184
      %s186 = sphi 0, %s184
      %s187 = sphi 0, %s186
      %s201 = sphi 0, %s187
      %s205 = sphi 0, %s205
      %s207 = sphi 0, %s205
      %s208 = sphi 0, %s207
      %s222 = sphi 0, %s208
      %s228 = sphi 0, %s230
      %s231 = sphi 0, %s228
      %s232 = sphi 0, %s231
      %s248 = sphi 0, %s232
      %s252 = sphi 0, %s252
      %s254 = sphi 0, %s252
      %s255 = sphi 0, %s254
      %s269 = sphi 0, %s255
    $region4: #{tpu_custom_call.1} parent=1 // loop_header_branch
      %27 = sbr.rel (%p25) target = $region8
    $region5: #{tpu_custom_call.1} parent=1 // loop_body
      %s29 = ssub.s32 %s24, 1
      %s30 = ssub.s32 %s24, 2
      %s31 = sadd.s32 %s24, 1
      %s32 = ssub.s32 %s24, %s31
      %p33 = scmp.eq.s32.totalorder %s32, 0
      %s35 = sadd.s32 %s34, 1
      %s36 = scalar_select %p33, %s34, %s35
      %p39 = pneg %p33
      %p40 = scmp.eq.s32.totalorder %s24, 5
      %p41 = por %p39, %p40
      %p42 = scmp.ne.s32.totalorder %s34, %s37
      %p43 = scmp.eq.s32.totalorder %s24, 0
      %p44 = por %p42, %p43
      %p45 = scmp.ne.s32.totalorder %s34, %s37
      %p46 = scmp.eq.s32.totalorder %s29, 5
      %p47 = por %p45, %p46
      %p48 = scmp.ne.s32.totalorder %s37, %s38
      %p49 = scmp.eq.s32.totalorder %s29, 0
      %p50 = por %p48, %p49
      %p51 = scmp.ne.s32.totalorder %s37, %s38
      %p52 = scmp.eq.s32.totalorder %s30, 5
      %p53 = por %p51, %p52
      %p55 = scmp.ne.s32.totalorder %s38, %s54
      %p56 = scmp.eq.s32.totalorder %s30, 0
      %p57 = por %p55, %p56
      %s59 = sadd.s32 %s58, 1
      %p62 = scmp.eq.s32.totalorder %s24, 5
      %p63 = scmp.ne.s32.totalorder %s58, %s60
      %p64 = scmp.eq.s32.totalorder %s24, 0
      %p65 = por %p63, %p64
      %p66 = scmp.ne.s32.totalorder %s58, %s60
      %p67 = scmp.eq.s32.totalorder %s29, 5
      %p68 = por %p66, %p67
      %p69 = scmp.ne.s32.totalorder %s60, %s61
      %p70 = scmp.eq.s32.totalorder %s29, 0
      %p71 = por %p69, %p70
      %p72 = scmp.ne.s32.totalorder %s60, %s61
      %p73 = scmp.eq.s32.totalorder %s30, 5
      %p74 = por %p72, %p73
      %p76 = scmp.ne.s32.totalorder %s61, %s75
      %p77 = scmp.eq.s32.totalorder %s30, 0
      %p78 = por %p76, %p77
      %s80 = sadd.s32 %s79, 1
      %p83 = scmp.eq.s32.totalorder %s24, 5
      %p84 = scmp.ne.s32.totalorder %s79, %s81
      %p85 = scmp.eq.s32.totalorder %s24, 0
      %p86 = por %p84, %p85
      %p87 = scmp.ne.s32.totalorder %s79, %s81
      %p88 = scmp.eq.s32.totalorder %s29, 5
      %p89 = por %p87, %p88
      %p90 = scmp.ne.s32.totalorder %s81, %s82
      %p91 = scmp.eq.s32.totalorder %s29, 0
      %p92 = por %p90, %p91
      %p93 = scmp.ne.s32.totalorder %s81, %s82
      %p94 = scmp.eq.s32.totalorder %s30, 5
      %p95 = por %p93, %p94
      %p97 = scmp.ne.s32.totalorder %s82, %s96
      %p98 = scmp.eq.s32.totalorder %s30, 0
      %p99 = por %p97, %p98
      %s101 = sadd.s32 %s100, 1
      %p104 = scmp.eq.s32.totalorder %s24, 5
      %p105 = scmp.ne.s32.totalorder %s100, %s102
      %p106 = scmp.eq.s32.totalorder %s24, 0
      %p107 = por %p105, %p106
      %p108 = scmp.ne.s32.totalorder %s100, %s102
      %p109 = scmp.eq.s32.totalorder %s29, 5
      %p110 = por %p108, %p109
      %p111 = scmp.ne.s32.totalorder %s102, %s103
      %p112 = scmp.eq.s32.totalorder %s29, 0
      %p113 = por %p111, %p112
      %p114 = scmp.ne.s32.totalorder %s102, %s103
      %p115 = scmp.eq.s32.totalorder %s30, 5
      %p116 = por %p114, %p115
      %p118 = scmp.ne.s32.totalorder %s103, %s117
      %p119 = scmp.eq.s32.totalorder %s30, 0
      %p120 = por %p118, %p119
      %s122 = sadd.s32 %s121, 1
      %p125 = scmp.eq.s32.totalorder %s24, 5
      %p126 = scmp.ne.s32.totalorder %s121, %s123
      %p127 = scmp.eq.s32.totalorder %s24, 0
      %p128 = por %p126, %p127
      %p129 = scmp.ne.s32.totalorder %s121, %s123
      %p130 = scmp.eq.s32.totalorder %s29, 5
      %p131 = por %p129, %p130
      %p132 = scmp.ne.s32.totalorder %s123, %s124
      %p133 = scmp.eq.s32.totalorder %s29, 0
      %p134 = por %p132, %p133
      %p135 = scmp.ne.s32.totalorder %s123, %s124
      %p136 = scmp.eq.s32.totalorder %s30, 5
      %p137 = por %p135, %p136
      %p139 = scmp.ne.s32.totalorder %s124, %s138
      %p140 = scmp.eq.s32.totalorder %s30, 0
      %p141 = por %p139, %p140
      %s143 = sadd.s32 %s142, 1
      %p146 = scmp.eq.s32.totalorder %s24, 5
      %p147 = scmp.ne.s32.totalorder %s142, %s144
      %p148 = scmp.eq.s32.totalorder %s24, 0
      %p149 = por %p147, %p148
      %p150 = scmp.ne.s32.totalorder %s142, %s144
      %p151 = scmp.eq.s32.totalorder %s29, 5
      %p152 = por %p150, %p151
      %p153 = scmp.ne.s32.totalorder %s144, %s145
      %p154 = scmp.eq.s32.totalorder %s29, 0
      %p155 = por %p153, %p154
      %p156 = scmp.ne.s32.totalorder %s144, %s145
      %p157 = scmp.eq.s32.totalorder %s30, 5
      %p158 = por %p156, %p157
      %p160 = scmp.ne.s32.totalorder %s145, %s159
      %p161 = scmp.eq.s32.totalorder %s30, 0
      %p162 = por %p160, %p161
      %s164 = sadd.s32 %s163, 1
      %p167 = scmp.eq.s32.totalorder %s24, 5
      %p168 = scmp.ne.s32.totalorder %s163, %s165
      %p169 = scmp.eq.s32.totalorder %s24, 0
      %p170 = por %p168, %p169
      %p171 = scmp.ne.s32.totalorder %s163, %s165
      %p172 = scmp.eq.s32.totalorder %s29, 5
      %p173 = por %p171, %p172
      %p174 = scmp.ne.s32.totalorder %s165, %s166
      %p175 = scmp.eq.s32.totalorder %s29, 0
      %p176 = por %p174, %p175
      %p177 = scmp.ne.s32.totalorder %s165, %s166
      %p178 = scmp.eq.s32.totalorder %s30, 5
      %p179 = por %p177, %p178
      %p181 = scmp.ne.s32.totalorder %s166, %s180
      %p182 = scmp.eq.s32.totalorder %s30, 0
      %p183 = por %p181, %p182
      %s185 = sadd.s32 %s184, 1
      %p188 = scmp.eq.s32.totalorder %s24, 5
      %p189 = scmp.ne.s32.totalorder %s184, %s186
      %p190 = scmp.eq.s32.totalorder %s24, 0
      %p191 = por %p189, %p190
      %p192 = scmp.ne.s32.totalorder %s184, %s186
      %p193 = scmp.eq.s32.totalorder %s29, 5
      %p194 = por %p192, %p193
      %p195 = scmp.ne.s32.totalorder %s186, %s187
      %p196 = scmp.eq.s32.totalorder %s29, 0
      %p197 = por %p195, %p196
      %p198 = scmp.ne.s32.totalorder %s186, %s187
      %p199 = scmp.eq.s32.totalorder %s30, 5
      %p200 = por %p198, %p199
      %p202 = scmp.ne.s32.totalorder %s187, %s201
      %p203 = scmp.eq.s32.totalorder %s30, 0
      %p204 = por %p202, %p203
      %s206 = sadd.s32 %s205, 1
      %p209 = scmp.eq.s32.totalorder %s24, 5
      %p210 = scmp.ne.s32.totalorder %s205, %s207
      %p211 = scmp.eq.s32.totalorder %s24, 0
      %p212 = por %p210, %p211
      %p213 = scmp.ne.s32.totalorder %s205, %s207
      %p214 = scmp.eq.s32.totalorder %s29, 5
      %p215 = por %p213, %p214
      %p216 = scmp.ne.s32.totalorder %s207, %s208
      %p217 = scmp.eq.s32.totalorder %s29, 0
      %p218 = por %p216, %p217
      %p219 = scmp.ne.s32.totalorder %s207, %s208
      %p220 = scmp.eq.s32.totalorder %s30, 5
      %p221 = por %p219, %p220
      %p223 = scmp.ne.s32.totalorder %s208, %s222
      %p224 = scmp.eq.s32.totalorder %s30, 0
      %p225 = por %p223, %p224
      %s226 = ssub.s32 %s24, %s31
      %p227 = scmp.eq.s32.totalorder %s226, 0
      %s229 = sadd.s32 %s228, 1
      %s230 = scalar_select %p227, %s228, %s229
      %p233 = pneg %p227
      %p234 = scmp.eq.s32.totalorder %s24, 5
      %p235 = por %p233, %p234
      %p236 = scmp.ne.s32.totalorder %s228, %s231
      %p237 = scmp.eq.s32.totalorder %s24, 0
      %p238 = por %p236, %p237
      %p239 = scmp.ne.s32.totalorder %s228, %s231
      %p240 = scmp.eq.s32.totalorder %s29, 5
      %p241 = por %p239, %p240
      %p242 = scmp.ne.s32.totalorder %s231, %s232
      %p243 = scmp.eq.s32.totalorder %s29, 0
      %p244 = por %p242, %p243
      %p245 = scmp.ne.s32.totalorder %s231, %s232
      %p246 = scmp.eq.s32.totalorder %s30, 5
      %p247 = por %p245, %p246
      %p249 = scmp.ne.s32.totalorder %s232, %s248
      %p250 = scmp.eq.s32.totalorder %s30, 0
      %p251 = por %p249, %p250
      %s253 = sadd.s32 %s252, 1
      %p256 = scmp.eq.s32.totalorder %s24, 5
      %p257 = scmp.ne.s32.totalorder %s252, %s254
      %p258 = scmp.eq.s32.totalorder %s24, 0
      %p259 = por %p257, %p258
      %p260 = scmp.ne.s32.totalorder %s252, %s254
      %p261 = scmp.eq.s32.totalorder %s29, 5
      %p262 = por %p260, %p261
      %p263 = scmp.ne.s32.totalorder %s254, %s255
      %p264 = scmp.eq.s32.totalorder %s29, 0
      %p265 = por %p263, %p264
      %p266 = scmp.ne.s32.totalorder %s254, %s255
      %p267 = scmp.eq.s32.totalorder %s30, 5
      %p268 = por %p266, %p267
      %p270 = scmp.ne.s32.totalorder %s255, %s269
      %p271 = scmp.eq.s32.totalorder %s30, 0
      %p272 = por %p270, %p271
      %p273 = scmp.le.s32.totalorder 1, %s24
      %p274 = scmp.lt.s32.totalorder %s24, 7
      %p275 = pnand %p273, %p274
      %p276 = pneg %p275
      // Predicated region
      $region9: #{tpu_custom_call.1} parent=5 // pred_check
        _
      $region10: #{tpu_custom_call.1} parent=5 // pred_check_branch
        %278 = sbr.rel (%p275) target = $region12
      $region11: #{tpu_custom_call.1} parent=5 // pred_region
        %s279 = ssub.s32 %s24, 1
        // Predicated region
        $region13: #{tpu_custom_call.1} parent=11 // pred_check
          %p280 = pneg %p71
        $region14: #{tpu_custom_call.1} parent=11 // pred_check_branch
          %282 = sbr.rel (%p280) target = $region16
        $region15: #{tpu_custom_call.1} parent=11 // pred_region
          %s284 = ssub.s32 128, 128
          %285 = vsyncadd [#allocation5], %s284
          %s287 = sshll.u32 [#allocation4], 4
          %s288 = int_to_ptr.vmem [resolvable:$true] %s287
          %290 = dma.hbm_to_vmem [thread:$0]  %s1, 128, %s288, [#allocation5]
        $region16: #{tpu_custom_call.1} parent=11 // pred_fallthru
          _
        // Predicated region
        $region17: #{tpu_custom_call.1} parent=11 // pred_check
          %p291 = pneg %p92
        $region18: #{tpu_custom_call.1} parent=11 // pred_check_branch
          %293 = sbr.rel (%p291) target = $region20
        $region19: #{tpu_custom_call.1} parent=11 // pred_region
          _
        $region20: #{tpu_custom_call.1} parent=11 // pred_fallthru
          _
        // Predicated region
        $region21: #{tpu_custom_call.1} parent=11 // pred_check
          %p294 = pneg %p113
        $region22: #{tpu_custom_call.1} parent=11 // pred_check_branch
          %296 = sbr.rel (%p294) target = $region24
        $region23: #{tpu_custom_call.1} parent=11 // pred_region
          %s298 = ssub.s32 512, 512
          %299 = vsyncadd [#allocation8], %s298
          %s300 = sshll.u32 [#allocation7], 4
          %s301 = int_to_ptr.vmem [resolvable:$true] %s300
          %306 = dma.hbm_to_vmem [thread:$0]  %s3, 512, %s301, [#allocation8], 128, 128, 8
        $region24: #{tpu_custom_call.1} parent=11 // pred_fallthru
          _
        // Predicated region
        $region25: #{tpu_custom_call.1} parent=11 // pred_check
          %p307 = pneg %p134
        $region26: #{tpu_custom_call.1} parent=11 // pred_check_branch
          %309 = sbr.rel (%p307) target = $region28
        $region27: #{tpu_custom_call.1} parent=11 // pred_region
          %s311 = ssub.s32 512, 512
          %312 = vsyncadd [#allocation8], %s311
          %s313 = sshll.u32 [#allocation9], 4
          %s314 = int_to_ptr.vmem [resolvable:$true] %s313
          %319 = dma.hbm_to_vmem [thread:$0]  %s4, 512, %s314, [#allocation8], 128, 128, 8
        $region28: #{tpu_custom_call.1} parent=11 // pred_fallthru
          _
        // Predicated region
        $region29: #{tpu_custom_call.1} parent=11 // pred_check
          %p320 = pneg %p155
        $region30: #{tpu_custom_call.1} parent=11 // pred_check_branch
          %322 = sbr.rel (%p320) target = $region32
        $region31: #{tpu_custom_call.1} parent=11 // pred_region
          %s324 = ssub.s32 512, 512
          %325 = vsyncadd [#allocation11], %s324
          %s326 = sshll.u32 [#allocation10], 4
          %s327 = int_to_ptr.vmem [resolvable:$true] %s326
          %332 = dma.hbm_to_vmem [thread:$0]  %s5, 512, %s327, [#allocation11], 128, 128, 8
        $region32: #{tpu_custom_call.1} parent=11 // pred_fallthru
          _
        // Predicated region
        $region33: #{tpu_custom_call.1} parent=11 // pred_check
          %p333 = pneg %p176
        $region34: #{tpu_custom_call.1} parent=11 // pred_check_branch
          %335 = sbr.rel (%p333) target = $region36
        $region35: #{tpu_custom_call.1} parent=11 // pred_region
          _
        $region36: #{tpu_custom_call.1} parent=11 // pred_fallthru
          _
        // Predicated region
        $region37: #{tpu_custom_call.1} parent=11 // pred_check
          %p336 = pneg %p197
        $region38: #{tpu_custom_call.1} parent=11 // pred_check_branch
          %338 = sbr.rel (%p336) target = $region40
        $region39: #{tpu_custom_call.1} parent=11 // pred_region
          %s340 = ssub.s32 512, 512
          %341 = vsyncadd [#allocation11], %s340
          %s342 = sshll.u32 [#allocation12], 4
          %s343 = int_to_ptr.vmem [resolvable:$true] %s342
          %348 = dma.hbm_to_vmem [thread:$0]  %s7, 512, %s343, [#allocation11], 128, 128, 8
        $region40: #{tpu_custom_call.1} parent=11 // pred_fallthru
          _
        // Predicated region
        $region41: #{tpu_custom_call.1} parent=11 // pred_check
          %p349 = pneg %p218
        $region42: #{tpu_custom_call.1} parent=11 // pred_check_branch
          %351 = sbr.rel (%p349) target = $region44
        $region43: #{tpu_custom_call.1} parent=11 // pred_region
          _
        $region44: #{tpu_custom_call.1} parent=11 // pred_fallthru
          _
      $region12: #{tpu_custom_call.1} parent=5 // pred_fallthru
        _
      %p352 = scmp.lt.s32.totalorder %s24, 6
      // Predicated region
      $region45: #{tpu_custom_call.1} parent=5 // pred_check
        %p353 = pneg %p352
      $region46: #{tpu_custom_call.1} parent=5 // pred_check_branch
        %355 = sbr.rel (%p353) target = $region48
      $region47: #{tpu_custom_call.1} parent=5 // pred_region
        // Predicated region
        $region49: #{tpu_custom_call.1} parent=47 // pred_check
          %p356 = pneg %p44
        $region50: #{tpu_custom_call.1} parent=47 // pred_check_branch
          %358 = sbr.rel (%p356) target = $region52
        $region51: #{tpu_custom_call.1} parent=47 // pred_region
          %p359 = scmp.lt.s32.totalorder %s24, 5
          %s360 = scalar_select %p359, %s24, 5
          %s361 = smul.addr %s360, 8
          %s362 = scalar_lea.vmem %s0, %s361
        $region52: #{tpu_custom_call.1} parent=47 // pred_fallthru
          _
      $region48: #{tpu_custom_call.1} parent=5 // pred_fallthru
        _
      %p363 = scmp.le.s32.totalorder 1, %s24
      %p364 = scmp.lt.s32.totalorder %s24, 7
      %p365 = pnand %p363, %p364
      %p366 = pneg %p365
      // Predicated region
      $region53: #{tpu_custom_call.1} parent=5 // pred_check
        _
      $region54: #{tpu_custom_call.1} parent=5 // pred_check_branch
        %368 = sbr.rel (%p365) target = $region56
      $region55: #{tpu_custom_call.1} parent=5 // pred_region
        %s369 = ssub.s32 %s24, 1
        // Predicated region
        $region57: #{tpu_custom_call.1} parent=55 // pred_check
          %p370 = pneg %p71
        $region58: #{tpu_custom_call.1} parent=55 // pred_check_branch
          %372 = sbr.rel (%p370) target = $region60
        $region59: #{tpu_custom_call.1} parent=55 // pred_region
          %373 = dma.done [#allocation5], 128
        $region60: #{tpu_custom_call.1} parent=55 // pred_fallthru
          _
        // Predicated region
        $region61: #{tpu_custom_call.1} parent=55 // pred_check
          %p374 = pneg %p113
        $region62: #{tpu_custom_call.1} parent=55 // pred_check_branch
          %376 = sbr.rel (%p374) target = $region64
        $region63: #{tpu_custom_call.1} parent=55 // pred_region
          %377 = dma.done [#allocation8], 512
        $region64: #{tpu_custom_call.1} parent=55 // pred_fallthru
          _
        // Predicated region
        $region65: #{tpu_custom_call.1} parent=55 // pred_check
          %p378 = pneg %p134
        $region66: #{tpu_custom_call.1} parent=55 // pred_check_branch
          %380 = sbr.rel (%p378) target = $region68
        $region67: #{tpu_custom_call.1} parent=55 // pred_region
          %381 = dma.done [#allocation8], 512
        $region68: #{tpu_custom_call.1} parent=55 // pred_fallthru
          _
        // Predicated region
        $region69: #{tpu_custom_call.1} parent=55 // pred_check
          %p382 = pneg %p155
        $region70: #{tpu_custom_call.1} parent=55 // pred_check_branch
          %384 = sbr.rel (%p382) target = $region72
        $region71: #{tpu_custom_call.1} parent=55 // pred_region
          %385 = dma.done [#allocation11], 512
        $region72: #{tpu_custom_call.1} parent=55 // pred_fallthru
          _
        // Predicated region
        $region73: #{tpu_custom_call.1} parent=55 // pred_check
          %p386 = pneg %p197
        $region74: #{tpu_custom_call.1} parent=55 // pred_check_branch
          %388 = sbr.rel (%p386) target = $region76
        $region75: #{tpu_custom_call.1} parent=55 // pred_region
          %389 = dma.done [#allocation11], 512
        $region76: #{tpu_custom_call.1} parent=55 // pred_fallthru
          _
        %p390 = scmp.lt.s32.totalorder %s29, 5
        %s391 = scalar_select %p390, %s29, 5
        %s392 = smul.addr %s391, 8
        %s393 = scalar_lea.vmem %s0, %s392
        %p394 = pneg %p50
        %p395 = pneg %p47
        %p396 = pneg %p71
        %p397 = pneg %p68
        %p398 = pneg %p92
        %p399 = pneg %p89
        %p400 = pneg %p113
        %p401 = pneg %p110
        %p402 = pneg %p134
        %p403 = pneg %p131
        %p404 = pneg %p155
        %p405 = pneg %p152
        %p406 = pneg %p176
        %p407 = pneg %p173
        %p408 = pneg %p197
        %p409 = pneg %p194
        %p410 = pneg %p218
        %p411 = pneg %p215
        %p412 = pneg %p244
        %p413 = pneg %p241
        %s414 = sand.u32 %s231, 1
        %s415 = scalar_lea.sflag [#allocation6], %s414
        %s416 = sand.u32 %s231, 1
        %s417 = smul.addr %s416, 8
        %s418 = scalar_lea.vmem [#allocation13], %s417
        %p419 = pneg %p265
        %p420 = pneg %p262
        %p421 = scmp.lt.s32.totalorder %s29, 5
        %s422 = scalar_select %p421, %s29, 5
        %s423 = smul.addr %s422, 8
        %s424 = scalar_lea.vmem %s0, %s423
        %p425 = scmp.eq.s32.totalorder %s29, 0
        // Predicated region
        $region77: #{tpu_custom_call.1} parent=55 // pred_check
          %p426 = pneg %p425
        $region78: #{tpu_custom_call.1} parent=55 // pred_check_branch
          %428 = sbr.rel (%p426) target = $region80
        $region79: #{tpu_custom_call.1} parent=55 // pred_region
          %v429 = vld [vmem:[#allocation4] sm:$0xff]
          %vm430 = vcmask 261120
          %431 = vst.msk [vmem:[#allocation2] sm:$0xff] %vm430, %v429
          %v432 = vld [vmem:[#allocation4] sm:$0xff]
          %434 = vrot.lane.b32.xlu0 %v432, 64
          %v435 = vpop.permute.xlu0 %434
          %437 = vst.msk [vmem:[#allocation3] sm:$0xff] %vm430, %v435
          %v438 = vld [vmem:[#allocation4] sm:$0xff]
          %440 = vrot.lane.b32.xlu0 %v438, 96
          %v441 = vpop.permute.xlu0 %440
          %s443 = scalar_lea.vmem [#allocation2], 8
          %444 = vst.msk [vmem:[%s443] sm:$0xff] %vm430, %v441
          %v445 = vld [vmem:[#allocation4] sm:$0xff]
          %447 = vrot.lane.b32.xlu0 %v445, 32
          %v448 = vpop.permute.xlu0 %447
          %s450 = scalar_lea.vmem [#allocation3], 8
          %451 = vst.msk [vmem:[%s450] sm:$0xff] %vm430, %v448
        $region80: #{tpu_custom_call.1} parent=55 // pred_fallthru
          _
        %v452 = vld [vmem:[%s424] sm:$0xff]
        %v453 = vlaneseq
        %v454 = vand.u32 %v453, 127
        %455 = vset.pattern.permute.xlu0 0
        %456 = vperm.xlu0 %455, %v452
        %v457 = vpop.permute.xlu0 %456
        %vm458 = vcmp.eq.s32.totalorder %v454, %v457
        %v459 = vsel %vm458, 1, 0
        %v460 = vcvt.s32.f32 %v459
        %v461 = vld [vmem:[#allocation2] sm:$0xff]
        %v462 = vld [vmem:[#allocation3] sm:$0xff]
        %v463 = vld [vmem:[%s2] sm:$0xff]
        %v464 = vld [vmem:[%s2 + $0x8] sm:$0xff]
        %v465 = vld [vmem:[%s2 + $0x10] sm:$0xff]
        %v466 = vld [vmem:[%s2 + $0x18] sm:$0xff]
        %v467 = vld [vmem:[%s2 + $0x20] sm:$0xff]
        %v468 = vld [vmem:[%s2 + $0x28] sm:$0xff]
        %v469 = vld [vmem:[%s2 + $0x30] sm:$0xff]
        %v470 = vld [vmem:[%s2 + $0x38] sm:$0xff]
        %v471 = vld [vmem:[#allocation7] sm:$0xff]
        %v472 = vld [vmem:[#allocation7 + $0x8] sm:$0xff]
        %v473 = vld [vmem:[#allocation7 + $0x10] sm:$0xff]
        %v474 = vld [vmem:[#allocation7 + $0x18] sm:$0xff]
        %vm475 = vcmask 261120
        %v477 = vsel %vm475, %v461, 0
        %479 = vmatprep.subr.mxu0 0.0
        %480 = vmatpush1.msra.mxu0 0.0
        %481 = vmatprep.subr.mxu0 0.0
        %482 = vmatpush1.msra.mxu0 0.0
        %483 = vmatprep.subr.mxu0 0.0
        %484 = vmatpush1.msra.mxu0 0.0
        %485 = vmatprep.subr.mxu0 0.0
        %486 = vmatpush1.msra.mxu0 0.0
        %487 = vmatprep.subr.mxu0 0.0
        %488 = vmatpush1.msra.mxu0 0.0
        %489 = vmatprep.subr.mxu0 0.0
        %490 = vmatpush1.msra.mxu0 0.0
        %491 = vmatprep.subr.mxu0 0.0
        %492 = vmatpush1.msra.mxu0 0.0
        %493 = vmatprep.subr.mxu0 0.0
        %494 = vmatpush1.msra.mxu0 0.0
        %495 = vmatprep.subr.mxu0 0.0
        %496 = vmatpush1.msra.mxu0 0.0
        %497 = vmatprep.subr.mxu0 0.0
        %498 = vmatpush1.msra.mxu0 0.0
        %499 = vmatprep.subr.mxu0 0.0
        %500 = vmatpush1.msra.mxu0 0.0
        %501 = vmatprep.subr.mxu0 0.0
        %502 = vmatpush1.msra.mxu0 0.0
        %503 = vmatprep.subr.mxu0 0.0
        %504 = vmatpush1.msra.mxu0 %v474
        %505 = vmatprep.subr.mxu0 0.0
        %506 = vmatpush1.msra.mxu0 %v473
        %507 = vmatprep.subr.mxu0 0.0
        %508 = vmatpush1.msra.mxu0 %v472
        %509 = vmatprep.subr.mxu0 0.0
        %510 = vmatpush1.msra.mxu0 %v471
        %511 = vmatprep.subr.mxu0 0.0
        %512 = vmatpush2.msra.mxu0 0.0
        %513 = vmatprep.subr.mxu0 0.0
        %514 = vmatpush2.msra.mxu0 0.0
        %515 = vmatprep.subr.mxu0 0.0
        %516 = vmatpush2.msra.mxu0 0.0
        %517 = vmatprep.subr.mxu0 0.0
        %518 = vmatpush2.msra.mxu0 0.0
        %519 = vmatprep.subr.mxu0 0.0
        %520 = vmatpush2.msra.mxu0 0.0
        %521 = vmatprep.subr.mxu0 0.0
        %522 = vmatpush2.msra.mxu0 0.0
        %523 = vmatprep.subr.mxu0 0.0
        %524 = vmatpush2.msra.mxu0 0.0
        %525 = vmatprep.subr.mxu0 0.0
        %526 = vmatpush2.msra.mxu0 0.0
        %527 = vmatprep.subr.mxu0 0.0
        %528 = vmatpush2.msra.mxu0 0.0
        %529 = vmatprep.subr.mxu0 0.0
        %530 = vmatpush2.msra.mxu0 0.0
        %531 = vmatprep.subr.mxu0 0.0
        %532 = vmatpush2.msra.mxu0 0.0
        %533 = vmatprep.subr.mxu0 0.0
        %534 = vmatpush2.msra.mxu0 0.0
        %535 = vmatprep.subr.mxu0 0.0
        %536 = vmatpush2.msra.mxu0 0.0
        %537 = vmatprep.subr.mxu0 0.0
        %538 = vmatpush2.msra.mxu0 0.0
        %539 = vmatprep.subr.mxu0 0.0
        %540 = vmatpush2.msra.mxu0 0.0
        %541 = vmatprep.subr.mxu0 0.0
        %542 = vmatpush2.msra.mxu0 0.0
        %543 = vmatprep.mubr.f32.mxu0 0.0
        %544 = vmatmul.mubr.f32.gmra.mxu0 %v477
        %v545 = vpop.f32.mrf.mxu0
        %v546 = vadd.f32 0.0, %v545
        %v547 = vpop.f32.mrf.mxu0
        %548 = vdwg.mxu0
        %vm549 = vcmask 523264
        %v551 = vsel %vm549, %v460, 0
        %553 = vmatprep.subr.mxu0 0.0
        %554 = vmatpush1.msra.mxu0 0.0
        %555 = vmatprep.subr.mxu0 0.0
        %556 = vmatpush1.msra.mxu0 0.0
        %557 = vmatprep.subr.mxu0 0.0
        %558 = vmatpush1.msra.mxu0 0.0
        %559 = vmatprep.subr.mxu0 0.0
        %560 = vmatpush1.msra.mxu0 0.0
        %561 = vmatprep.subr.mxu0 0.0
        %562 = vmatpush1.msra.mxu0 0.0
        %563 = vmatprep.subr.mxu0 0.0
        %564 = vmatpush1.msra.mxu0 0.0
        %565 = vmatprep.subr.mxu0 0.0
        %566 = vmatpush1.msra.mxu0 0.0
        %567 = vmatprep.subr.mxu0 0.0
        %568 = vmatpush1.msra.mxu0 0.0
        %569 = vmatprep.subr.mxu0 0.0
        %570 = vmatpush1.msra.mxu0 %v470
        %571 = vmatprep.subr.mxu0 0.0
        %572 = vmatpush1.msra.mxu0 %v469
        %573 = vmatprep.subr.mxu0 0.0
        %574 = vmatpush1.msra.mxu0 %v468
        %575 = vmatprep.subr.mxu0 0.0
        %576 = vmatpush1.msra.mxu0 %v467
        %577 = vmatprep.subr.mxu0 0.0
        %578 = vmatpush1.msra.mxu0 %v466
        %579 = vmatprep.subr.mxu0 0.0
        %580 = vmatpush1.msra.mxu0 %v465
        %581 = vmatprep.subr.mxu0 0.0
        %582 = vmatpush1.msra.mxu0 %v464
        %583 = vmatprep.subr.mxu0 0.0
        %584 = vmatpush1.msra.mxu0 %v463
        %585 = vmatprep.subr.mxu0 0.0
        %586 = vmatpush2.msra.mxu0 0.0
        %587 = vmatprep.subr.mxu0 0.0
        %588 = vmatpush2.msra.mxu0 0.0
        %589 = vmatprep.subr.mxu0 0.0
        %590 = vmatpush2.msra.mxu0 0.0
        %591 = vmatprep.subr.mxu0 0.0
        %592 = vmatpush2.msra.mxu0 0.0
        %593 = vmatprep.subr.mxu0 0.0
        %594 = vmatpush2.msra.mxu0 0.0
        %595 = vmatprep.subr.mxu0 0.0
        %596 = vmatpush2.msra.mxu0 0.0
        %597 = vmatprep.subr.mxu0 0.0
        %598 = vmatpush2.msra.mxu0 0.0
        %599 = vmatprep.subr.mxu0 0.0
        %600 = vmatpush2.msra.mxu0 0.0
        %601 = vmatprep.subr.mxu0 0.0
        %602 = vmatpush2.msra.mxu0 0.0
        %603 = vmatprep.subr.mxu0 0.0
        %604 = vmatpush2.msra.mxu0 0.0
        %605 = vmatprep.subr.mxu0 0.0
        %606 = vmatpush2.msra.mxu0 0.0
        %607 = vmatprep.subr.mxu0 0.0
        %608 = vmatpush2.msra.mxu0 0.0
        %609 = vmatprep.subr.mxu0 0.0
        %610 = vmatpush2.msra.mxu0 0.0
        %611 = vmatprep.subr.mxu0 0.0
        %612 = vmatpush2.msra.mxu0 0.0
        %613 = vmatprep.subr.mxu0 0.0
        %614 = vmatpush2.msra.mxu0 0.0
        %615 = vmatprep.subr.mxu0 0.0
        %616 = vmatpush2.msra.mxu0 0.0
        %617 = vmatprep.mubr.f32.mxu0 0.0
        %618 = vmatmul.mubr.f32.gmra.mxu0 %v551
        %v619 = vpop.f32.mrf.mxu0
        %v620 = vadd.f32 %v546, %v619
        %v621 = vpop.f32.mrf.mxu0
        %622 = vdwg.mxu0
        %v623 = vmul.f32 %v620, 0.5
        %v624 = vtanh.pop %v623
        %v625 = vadd.f32 %v624, 1.0
        %v626 = vmul.f32 %v625, 0.5
        %v627 = vtanh.pop %v620
        %629 = vrot.lane.b32.xlu0 %v462, 32
        %v630 = vpop.permute.xlu0 %629
        %v632 = vmul.f32 %v626, %v630
        %634 = vrot.lane.b32.xlu0 %v627, 64
        %v635 = vpop.permute.xlu0 %634
        %v637 = vmul.f32 %v626, %v635
        %639 = vrot.lane.b32.xlu0 %v637, 32
        %v640 = vpop.permute.xlu0 %639
        %v642 = vadd.f32 %v632, %v640
        %v643 = vtanh.pop %v642
        %645 = vrot.lane.b32.xlu0 %v643, 64
        %v646 = vpop.permute.xlu0 %645
        %v648 = vmul.f32 %v626, %v646
        %650 = vrot.lane.b32.xlu0 %v648, 32
        %v651 = vpop.permute.xlu0 %650
        %653 = vst.msk [vmem:[#allocation2] sm:$0xff] %vm475, %v651
        %655 = vrot.lane.b32.xlu0 %v642, 96
        %v656 = vpop.permute.xlu0 %655
        %658 = vst.msk [vmem:[#allocation3] sm:$0xff] %vm475, %v656
        %s659 = scalar_lea.vmem [#allocation2], 8
        %v660 = vld [vmem:[%s659] sm:$0xff]
        %s661 = scalar_lea.vmem [#allocation3], 8
        %v662 = vld [vmem:[%s661] sm:$0xff]
        %v663 = vld [vmem:[#allocation9] sm:$0xff]
        %v664 = vld [vmem:[#allocation9 + $0x8] sm:$0xff]
        %v665 = vld [vmem:[#allocation9 + $0x10] sm:$0xff]
        %v666 = vld [vmem:[#allocation9 + $0x18] sm:$0xff]
        %v667 = vld [vmem:[#allocation10] sm:$0xff]
        %v668 = vld [vmem:[#allocation10 + $0x8] sm:$0xff]
        %v669 = vld [vmem:[#allocation10 + $0x10] sm:$0xff]
        %v670 = vld [vmem:[#allocation10 + $0x18] sm:$0xff]
        %v672 = vsel %vm475, %v660, 0
        %674 = vmatprep.subr.mxu0 0.0
        %675 = vmatpush1.msra.mxu0 0.0
        %676 = vmatprep.subr.mxu0 0.0
        %677 = vmatpush1.msra.mxu0 0.0
        %678 = vmatprep.subr.mxu0 0.0
        %679 = vmatpush1.msra.mxu0 0.0
        %680 = vmatprep.subr.mxu0 0.0
        %681 = vmatpush1.msra.mxu0 0.0
        %682 = vmatprep.subr.mxu0 0.0
        %683 = vmatpush1.msra.mxu0 0.0
        %684 = vmatprep.subr.mxu0 0.0
        %685 = vmatpush1.msra.mxu0 0.0
        %686 = vmatprep.subr.mxu0 0.0
        %687 = vmatpush1.msra.mxu0 0.0
        %688 = vmatprep.subr.mxu0 0.0
        %689 = vmatpush1.msra.mxu0 0.0
        %690 = vmatprep.subr.mxu0 0.0
        %691 = vmatpush1.msra.mxu0 0.0
        %692 = vmatprep.subr.mxu0 0.0
        %693 = vmatpush1.msra.mxu0 0.0
        %694 = vmatprep.subr.mxu0 0.0
        %695 = vmatpush1.msra.mxu0 0.0
        %696 = vmatprep.subr.mxu0 0.0
        %697 = vmatpush1.msra.mxu0 0.0
        %698 = vmatprep.subr.mxu0 0.0
        %699 = vmatpush1.msra.mxu0 %v670
        %700 = vmatprep.subr.mxu0 0.0
        %701 = vmatpush1.msra.mxu0 %v669
        %702 = vmatprep.subr.mxu0 0.0
        %703 = vmatpush1.msra.mxu0 %v668
        %704 = vmatprep.subr.mxu0 0.0
        %705 = vmatpush1.msra.mxu0 %v667
        %706 = vmatprep.subr.mxu0 0.0
        %707 = vmatpush2.msra.mxu0 0.0
        %708 = vmatprep.subr.mxu0 0.0
        %709 = vmatpush2.msra.mxu0 0.0
        %710 = vmatprep.subr.mxu0 0.0
        %711 = vmatpush2.msra.mxu0 0.0
        %712 = vmatprep.subr.mxu0 0.0
        %713 = vmatpush2.msra.mxu0 0.0
        %714 = vmatprep.subr.mxu0 0.0
        %715 = vmatpush2.msra.mxu0 0.0
        %716 = vmatprep.subr.mxu0 0.0
        %717 = vmatpush2.msra.mxu0 0.0
        %718 = vmatprep.subr.mxu0 0.0
        %719 = vmatpush2.msra.mxu0 0.0
        %720 = vmatprep.subr.mxu0 0.0
        %721 = vmatpush2.msra.mxu0 0.0
        %722 = vmatprep.subr.mxu0 0.0
        %723 = vmatpush2.msra.mxu0 0.0
        %724 = vmatprep.subr.mxu0 0.0
        %725 = vmatpush2.msra.mxu0 0.0
        %726 = vmatprep.subr.mxu0 0.0
        %727 = vmatpush2.msra.mxu0 0.0
        %728 = vmatprep.subr.mxu0 0.0
        %729 = vmatpush2.msra.mxu0 0.0
        %730 = vmatprep.subr.mxu0 0.0
        %731 = vmatpush2.msra.mxu0 0.0
        %732 = vmatprep.subr.mxu0 0.0
        %733 = vmatpush2.msra.mxu0 0.0
        %734 = vmatprep.subr.mxu0 0.0
        %735 = vmatpush2.msra.mxu0 0.0
        %736 = vmatprep.subr.mxu0 0.0
        %737 = vmatpush2.msra.mxu0 0.0
        %738 = vmatprep.mubr.f32.mxu0 0.0
        %739 = vmatmul.mubr.f32.gmra.mxu0 %v672
        %v740 = vpop.f32.mrf.mxu0
        %v741 = vadd.f32 0.0, %v740
        %v742 = vpop.f32.mrf.mxu0
        %743 = vdwg.mxu0
        %v744 = vsel %vm475, %v651, 0
        %746 = vmatprep.subr.mxu0 0.0
        %747 = vmatpush1.msra.mxu0 0.0
        %748 = vmatprep.subr.mxu0 0.0
        %749 = vmatpush1.msra.mxu0 0.0
        %750 = vmatprep.subr.mxu0 0.0
        %751 = vmatpush1.msra.mxu0 0.0
        %752 = vmatprep.subr.mxu0 0.0
        %753 = vmatpush1.msra.mxu0 0.0
        %754 = vmatprep.subr.mxu0 0.0
        %755 = vmatpush1.msra.mxu0 0.0
        %756 = vmatprep.subr.mxu0 0.0
        %757 = vmatpush1.msra.mxu0 0.0
        %758 = vmatprep.subr.mxu0 0.0
        %759 = vmatpush1.msra.mxu0 0.0
        %760 = vmatprep.subr.mxu0 0.0
        %761 = vmatpush1.msra.mxu0 0.0
        %762 = vmatprep.subr.mxu0 0.0
        %763 = vmatpush1.msra.mxu0 0.0
        %764 = vmatprep.subr.mxu0 0.0
        %765 = vmatpush1.msra.mxu0 0.0
        %766 = vmatprep.subr.mxu0 0.0
        %767 = vmatpush1.msra.mxu0 0.0
        %768 = vmatprep.subr.mxu0 0.0
        %769 = vmatpush1.msra.mxu0 0.0
        %770 = vmatprep.subr.mxu0 0.0
        %771 = vmatpush1.msra.mxu0 %v666
        %772 = vmatprep.subr.mxu0 0.0
        %773 = vmatpush1.msra.mxu0 %v665
        %774 = vmatprep.subr.mxu0 0.0
        %775 = vmatpush1.msra.mxu0 %v664
        %776 = vmatprep.subr.mxu0 0.0
        %777 = vmatpush1.msra.mxu0 %v663
        %778 = vmatprep.subr.mxu0 0.0
        %779 = vmatpush2.msra.mxu0 0.0
        %780 = vmatprep.subr.mxu0 0.0
        %781 = vmatpush2.msra.mxu0 0.0
        %782 = vmatprep.subr.mxu0 0.0
        %783 = vmatpush2.msra.mxu0 0.0
        %784 = vmatprep.subr.mxu0 0.0
        %785 = vmatpush2.msra.mxu0 0.0
        %786 = vmatprep.subr.mxu0 0.0
        %787 = vmatpush2.msra.mxu0 0.0
        %788 = vmatprep.subr.mxu0 0.0
        %789 = vmatpush2.msra.mxu0 0.0
        %790 = vmatprep.subr.mxu0 0.0
        %791 = vmatpush2.msra.mxu0 0.0
        %792 = vmatprep.subr.mxu0 0.0
        %793 = vmatpush2.msra.mxu0 0.0
        %794 = vmatprep.subr.mxu0 0.0
        %795 = vmatpush2.msra.mxu0 0.0
        %796 = vmatprep.subr.mxu0 0.0
        %797 = vmatpush2.msra.mxu0 0.0
        %798 = vmatprep.subr.mxu0 0.0
        %799 = vmatpush2.msra.mxu0 0.0
        %800 = vmatprep.subr.mxu0 0.0
        %801 = vmatpush2.msra.mxu0 0.0
        %802 = vmatprep.subr.mxu0 0.0
        %803 = vmatpush2.msra.mxu0 0.0
        %804 = vmatprep.subr.mxu0 0.0
        %805 = vmatpush2.msra.mxu0 0.0
        %806 = vmatprep.subr.mxu0 0.0
        %807 = vmatpush2.msra.mxu0 0.0
        %808 = vmatprep.subr.mxu0 0.0
        %809 = vmatpush2.msra.mxu0 0.0
        %810 = vmatprep.mubr.f32.mxu0 0.0
        %811 = vmatmul.mubr.f32.gmra.mxu0 %v744
        %v812 = vpop.f32.mrf.mxu0
        %v813 = vadd.f32 %v741, %v812
        %v814 = vpop.f32.mrf.mxu0
        %815 = vdwg.mxu0
        %v816 = vld [vmem:[%s6] sm:$0x1]
        %v818 = vlaneseq
        %v819 = vshrl.u32 %v818, 7
        %v820 = vsub.s32 0, %v819
        %v821 = vrot.slane %v816, %v820
        %v823 = vadd.f32 %v813, %v821
        %v824 = vmul.f32 %v823, 0.5
        %v825 = vtanh.pop %v824
        %v826 = vadd.f32 %v825, 1.0
        %v827 = vmul.f32 %v826, 0.5
        %v828 = vtanh.pop %v823
        %830 = vrot.lane.b32.xlu0 %v662, 32
        %v831 = vpop.permute.xlu0 %830
        %v833 = vmul.f32 %v827, %v831
        %835 = vrot.lane.b32.xlu0 %v828, 64
        %v836 = vpop.permute.xlu0 %835
        %v838 = vmul.f32 %v827, %v836
        %840 = vrot.lane.b32.xlu0 %v838, 32
        %v841 = vpop.permute.xlu0 %840
        %v843 = vadd.f32 %v833, %v841
        %v844 = vtanh.pop %v843
        %846 = vrot.lane.b32.xlu0 %v844, 64
        %v847 = vpop.permute.xlu0 %846
        %v849 = vmul.f32 %v827, %v847
        %851 = vrot.lane.b32.xlu0 %v849, 32
        %v852 = vpop.permute.xlu0 %851
        %854 = vst.msk [vmem:[%s659] sm:$0xff] %vm475, %v852
        %856 = vrot.lane.b32.xlu0 %v843, 96
        %v857 = vpop.permute.xlu0 %856
        %859 = vst.msk [vmem:[%s661] sm:$0xff] %vm475, %v857
        %v860 = vld [vmem:[#allocation12] sm:$0xff]
        %v861 = vld [vmem:[#allocation12 + $0x8] sm:$0xff]
        %v862 = vld [vmem:[#allocation12 + $0x10] sm:$0xff]
        %v863 = vld [vmem:[#allocation12 + $0x18] sm:$0xff]
        %v864 = vld [vmem:[%s8] sm:$0x1]
        %v866 = vlaneseq
        %v867 = vshrl.u32 %v866, 7
        %v868 = vsub.s32 0, %v867
        %v869 = vrot.slane %v864, %v868
        %v871 = vsel %vm475, %v852, 0
        %873 = vmatprep.subr.mxu0 0.0
        %874 = vmatpush1.msra.mxu0 0.0
        %875 = vmatprep.subr.mxu0 0.0
        %876 = vmatpush1.msra.mxu0 0.0
        %877 = vmatprep.subr.mxu0 0.0
        %878 = vmatpush1.msra.mxu0 0.0
        %879 = vmatprep.subr.mxu0 0.0
        %880 = vmatpush1.msra.mxu0 0.0
        %881 = vmatprep.subr.mxu0 0.0
        %882 = vmatpush1.msra.mxu0 0.0
        %883 = vmatprep.subr.mxu0 0.0
        %884 = vmatpush1.msra.mxu0 0.0
        %885 = vmatprep.subr.mxu0 0.0
        %886 = vmatpush1.msra.mxu0 0.0
        %887 = vmatprep.subr.mxu0 0.0
        %888 = vmatpush1.msra.mxu0 0.0
        %889 = vmatprep.subr.mxu0 0.0
        %890 = vmatpush1.msra.mxu0 0.0
        %891 = vmatprep.subr.mxu0 0.0
        %892 = vmatpush1.msra.mxu0 0.0
        %893 = vmatprep.subr.mxu0 0.0
        %894 = vmatpush1.msra.mxu0 0.0
        %895 = vmatprep.subr.mxu0 0.0
        %896 = vmatpush1.msra.mxu0 0.0
        %897 = vmatprep.subr.mxu0 0.0
        %898 = vmatpush1.msra.mxu0 %v863
        %899 = vmatprep.subr.mxu0 0.0
        %900 = vmatpush1.msra.mxu0 %v862
        %901 = vmatprep.subr.mxu0 0.0
        %902 = vmatpush1.msra.mxu0 %v861
        %903 = vmatprep.subr.mxu0 0.0
        %904 = vmatpush1.msra.mxu0 %v860
        %905 = vmatprep.subr.mxu0 0.0
        %906 = vmatpush2.msra.mxu0 0.0
        %907 = vmatprep.subr.mxu0 0.0
        %908 = vmatpush2.msra.mxu0 0.0
        %909 = vmatprep.subr.mxu0 0.0
        %910 = vmatpush2.msra.mxu0 0.0
        %911 = vmatprep.subr.mxu0 0.0
        %912 = vmatpush2.msra.mxu0 0.0
        %913 = vmatprep.subr.mxu0 0.0
        %914 = vmatpush2.msra.mxu0 0.0
        %915 = vmatprep.subr.mxu0 0.0
        %916 = vmatpush2.msra.mxu0 0.0
        %917 = vmatprep.subr.mxu0 0.0
        %918 = vmatpush2.msra.mxu0 0.0
        %919 = vmatprep.subr.mxu0 0.0
        %920 = vmatpush2.msra.mxu0 0.0
        %921 = vmatprep.subr.mxu0 0.0
        %922 = vmatpush2.msra.mxu0 0.0
        %923 = vmatprep.subr.mxu0 0.0
        %924 = vmatpush2.msra.mxu0 0.0
        %925 = vmatprep.subr.mxu0 0.0
        %926 = vmatpush2.msra.mxu0 0.0
        %927 = vmatprep.subr.mxu0 0.0
        %928 = vmatpush2.msra.mxu0 0.0
        %929 = vmatprep.subr.mxu0 0.0
        %930 = vmatpush2.msra.mxu0 0.0
        %931 = vmatprep.subr.mxu0 0.0
        %932 = vmatpush2.msra.mxu0 0.0
        %933 = vmatprep.subr.mxu0 0.0
        %934 = vmatpush2.msra.mxu0 0.0
        %935 = vmatprep.subr.mxu0 0.0
        %936 = vmatpush2.msra.mxu0 0.0
        %937 = vmatprep.mubr.f32.mxu0 0.0
        %938 = vmatmul.mubr.f32.gmra.mxu0 %v871
        %v939 = vpop.f32.mrf.mxu0
        %v940 = vadd.f32 %v869, %v939
        %v941 = vpop.f32.mrf.mxu0
        %942 = vdwg.mxu0
        %943 = vst [vmem:[%s418] sm:$0xff] %v940
        %p944 = scmp.eq.s32.totalorder %s29, 5
        // Predicated region
        $region81: #{tpu_custom_call.1} parent=55 // pred_check
          %p945 = pneg %p944
        $region82: #{tpu_custom_call.1} parent=55 // pred_check_branch
          %947 = sbr.rel (%p945) target = $region84
        $region83: #{tpu_custom_call.1} parent=55 // pred_region
          %948 = vrot.lane.b32.xlu0 %v849, 64
          %v949 = vpop.permute.xlu0 %948
          %951 = vrot.lane.b32.xlu0 %v642, 32
          %v952 = vpop.permute.xlu0 %951
          %954 = vrot.lane.b32.xlu0 %v843, 64
          %v955 = vpop.permute.xlu0 %954
          %v957 = vsel %vm475, %v651, %v949
          %v958 = vsel %vm549, %v957, %v952
          %vm959 = vcmask 785408
          %v960 = vsel %vm959, %v958, %v955
          %961 = vst [vmem:[#allocation14] sm:$0xff] %v960
        $region84: #{tpu_custom_call.1} parent=55 // pred_fallthru
          _
        %s962 = sand.u32 %s231, 1
        %s963 = scalar_lea.sflag [#allocation6], %s962
        %s964 = sand.u32 %s231, 1
        %s965 = smul.addr %s964, 8
        %s966 = scalar_lea.vmem [#allocation13], %s965
        // Predicated region
        $region85: #{tpu_custom_call.1} parent=55 // pred_check
          %p967 = pneg %p241
        $region86: #{tpu_custom_call.1} parent=55 // pred_check_branch
          %969 = sbr.rel (%p967) target = $region88
        $region87: #{tpu_custom_call.1} parent=55 // pred_region
          %s971 = ssub.s32 128, 128
          %972 = vsyncadd %s963, %s971
          %s973 = smul.addr %s29, 128
          %s974 = scalar_lea.hbm %s9, %s973
          %s976 = sshll.u32 %s966, 4
          %s977 = int_to_ptr.vmem [resolvable:$true] %s976
          %979 = dma.vmem_to_hbm [thread:$0]  %s977, 128, %s974, %s963
        $region88: #{tpu_custom_call.1} parent=55 // pred_fallthru
          _
        // Predicated region
        $region89: #{tpu_custom_call.1} parent=55 // pred_check
          %p980 = pneg %p262
        $region90: #{tpu_custom_call.1} parent=55 // pred_check_branch
          %982 = sbr.rel (%p980) target = $region92
        $region91: #{tpu_custom_call.1} parent=55 // pred_region
          %s984 = ssub.s32 128, 128
          %985 = vsyncadd [#allocation15], %s984
          %s987 = sshll.u32 [#allocation14], 4
          %s988 = int_to_ptr.vmem [resolvable:$true] %s987
          %990 = dma.vmem_to_hbm [thread:$0]  %s988, 128, %s10, [#allocation15]
        $region92: #{tpu_custom_call.1} parent=55 // pred_fallthru
          _
        // Predicated region
        $region93: #{tpu_custom_call.1} parent=55 // pred_check
          %p991 = pneg %p262
        $region94: #{tpu_custom_call.1} parent=55 // pred_check_branch
          %993 = sbr.rel (%p991) target = $region96
        $region95: #{tpu_custom_call.1} parent=55 // pred_region
          %994 = dma.done [#allocation15], 128
        $region96: #{tpu_custom_call.1} parent=55 // pred_fallthru
          _
      $region56: #{tpu_custom_call.1} parent=5 // pred_fallthru
        _
      %p995 = scmp.le.s32.totalorder 2, %s24
      // Predicated region
      $region97: #{tpu_custom_call.1} parent=5 // pred_check
        %p996 = pneg %p995
      $region98: #{tpu_custom_call.1} parent=5 // pred_check_branch
        %998 = sbr.rel (%p996) target = $region100
      $region99: #{tpu_custom_call.1} parent=5 // pred_region
        %s999 = ssub.s32 %s24, 2
        // Predicated region
        $region101: #{tpu_custom_call.1} parent=99 // pred_check
          %p1000 = pneg %p247
        $region102: #{tpu_custom_call.1} parent=99 // pred_check_branch
          %1002 = sbr.rel (%p1000) target = $region104
        $region103: #{tpu_custom_call.1} parent=99 // pred_region
          %s1003 = sand.u32 %s232, 1
          %s1004 = scalar_lea.sflag [#allocation6], %s1003
          %s1005 = sand.u32 %s232, 1
          %s1006 = smul.addr %s1005, 8
          %s1007 = scalar_lea.vmem [#allocation13], %s1006
          %1008 = dma.done %s1004, 128
        $region104: #{tpu_custom_call.1} parent=99 // pred_fallthru
          _
      $region100: #{tpu_custom_call.1} parent=5 // pred_fallthru
        _
    $region6: #{tpu_custom_call.1} parent=1 // loop_footer
      %s28 = sadd.s32 1, %s24
    $region7: #{tpu_custom_call.1} parent=1 // loop_footer_branch
      %23 = sbr.rel target = $region3
    $region8: #{tpu_custom_call.1} parent=1 // loop_exit
      _
    %1009 = vsyncpa [#allocation5], 1
    %s1010 = scalar_lea.sflag [#allocation5], 1
    %1011 = vsyncpa %s1010, 1
    %1012 = vsyncpa [#allocation8], 1
    %1013 = vsyncpa [#allocation11], 1
    %1014 = vsyncpa [#allocation6], 1
    %s1015 = scalar_lea.sflag [#allocation6], 1
    %1016 = vsyncpa %s1015, 1
    %1017 = vsyncpa [#allocation15], 1

</llo_original>
